<compile_context>
chip_gen: v7x
topology: tpu7x:2x2x1
jax: 0.10.0
libtpu: 0.0.40
codegen_flags: <defaults>
</compile_context>

<pallas_src>
import functools

import jax
import jax.numpy as jnp
import numpy as np
from jax.experimental import pallas as pl
from jax.experimental.pallas import tpu as pltpu


def _round_up(x, m):
    return ((x + m - 1) // m) * m


def _softplus(x):
    # numerically stable softplus, matches F.softplus
    return jnp.maximum(x, 0.0) + jnp.log(1.0 + jnp.exp(-jnp.abs(x)))


def _decoder_kernel(r_ref, z_ref, tx_ref,
                    w1r_ref, w1z_ref, w1x_ref, b1_ref,
                    w2_ref, b2_ref,
                    whT_ref, bhT_ref,
                    out_ref, *, min_std, y_dim):
    cdt = w2_ref.dtype  # compute dtype for MXU operands (bf16 fast path or f32)

    # Layer 1: (r | z | x) @ W1 with the target transform folded into w1x.
    # Three accumulating MXU dots replace the lane concat entirely.
    h = jnp.dot(r_ref[...].astype(cdt), w1r_ref[...],
                preferred_element_type=jnp.float32)
    h = h + jnp.dot(z_ref[...].astype(cdt), w1z_ref[...],
                    preferred_element_type=jnp.float32)
    h = h + jnp.dot(tx_ref[...].astype(cdt), w1x_ref[...],
                    preferred_element_type=jnp.float32)
    h = jnp.maximum(h + b1_ref[...], 0.0).astype(cdt)

    # Layer 2 (Linear + ReLU)
    h = jnp.maximum(
        jnp.dot(h, w2_ref[...], preferred_element_type=jnp.float32)
        + b2_ref[...], 0.0).astype(cdt)

    # Fused, transposed head (layer 3 folded in at prep time).
    # whT rows: [mean (Yd) | log_sigma (Yd) | log_sigma again (Yd) | zero pad]
    # dot_general with trans_b gives the result already transposed -> the
    # output tile is (HR, tm): rows on sublanes, the big M dim on lanes.
    hdT = jax.lax.dot_general(
        whT_ref[...], h, (((1,), (1,)), ((), ())),
        preferred_element_type=jnp.float32) + bhT_ref[...]

    rows = jax.lax.broadcasted_iota(jnp.int32, hdT.shape, 0)
    is_sigma_row = (rows >= 2 * y_dim) & (rows < 3 * y_dim)
    sigma = min_std + (1.0 - min_std) * _softplus(hdT)
    out_ref[...] = jnp.where(is_sigma_row, sigma, hdT).astype(out_ref.dtype)


def prepare_decoder_params(params, *, compute_dtype=jnp.bfloat16, lane_pad=128):
    """Fold Wt into W1, fold W3 + head into one transposed head, lane-pad H2."""
    hp = jax.lax.Precision.HIGHEST

    wt, bt = params["wt"], params["bt"]     # (Xd, H), (1, H)
    w1, b1 = params["w1"], params["b1"]     # (H2, H2), (1, H2)
    w2, b2 = params["w2"], params["b2"]
    w3, b3 = params["w3"], params["b3"]
    wm, bm = params["wm"], params["bm"]     # (H2, Yd), (1, Yd)
    ws, bs = params["ws"], params["bs"]

    H = wt.shape[1]
    H2 = w1.shape[0]
    L = H2 - 2 * H
    Yd = wm.shape[1]
    H2p = _round_up(H2, lane_pad)
    HR = _round_up(3 * Yd, 8)               # sublane-padded head rows

    # Split W1 by input block; fold x = tx @ Wt + bt into the x-block.
    w1r = w1[:H]
    w1z = w1[H:H + L]
    w1x = w1[H + L:]
    w1x_folded = jnp.dot(wt, w1x, precision=hp)          # (Xd, H2)
    b1_folded = b1 + jnp.dot(bt, w1x, precision=hp)      # (1, H2)

    # Head fusion: layer 3 (no activation) folded into [Wm | Ws].
    wh = jnp.concatenate([wm, ws], axis=1)                # (H2, 2Yd)
    bh = jnp.concatenate([bm, bs], axis=1)                # (1, 2Yd)
    w3h = jnp.dot(w3, wh, precision=hp)                   # (H2, 2Yd)
    b3h = jnp.dot(b3, wh, precision=hp) + bh              # (1, 2Yd)

    # Transposed head, rows = [mean | log_sigma | log_sigma (sigma source)].
    whT = jnp.concatenate(
        [w3h[:, :Yd].T, w3h[:, Yd:].T, w3h[:, Yd:].T], axis=0)  # (3Yd, H2)
    bhT = jnp.concatenate(
        [b3h[:, :Yd].T, b3h[:, Yd:].T, b3h[:, Yd:].T], axis=0)  # (3Yd, 1)

    def pad_to(a, rows, cols):
        return jnp.pad(a, ((0, rows - a.shape[0]), (0, cols - a.shape[1])))

    return dict(
        w1r=pad_to(w1r, H, H2p).astype(compute_dtype),
        w1z=pad_to(w1z, L, H2p).astype(compute_dtype),
        w1x=pad_to(w1x_folded, w1x_folded.shape[0], H2p).astype(compute_dtype),
        b1=pad_to(b1_folded, 1, H2p).astype(jnp.float32),
        w2=pad_to(w2, H2p, H2p).astype(compute_dtype),
        b2=pad_to(b2, 1, H2p).astype(jnp.float32),
        whT=pad_to(whT, HR, H2p).astype(compute_dtype),
        bhT=pad_to(bhT, HR, 1).astype(jnp.float32),
        y_dim=Yd,
    )


def decoder_forward(r, z, target_x, prepped, *, min_std=0.01, tm=1024):
    """r: [B,T,H], z: [B,T,L], target_x: [B,T,x_dim] -> (mean, sigma, log_sigma)."""
    B, T, H = r.shape
    L = z.shape[-1]
    Xd = target_x.shape[-1]
    Yd = prepped["y_dim"]
    HR = prepped["whT"].shape[0]
    H2p = prepped["w2"].shape[0]
    M = B * T

    # Row tile: multiple of 128 (it becomes the lane axis of the transposed
    # output), large to amortize per-step overhead, capped so the grid has at
    # least 2 parallel steps when M allows it (keeps both v7x TCs busy).
    tm_eff = max(128, min(_round_up(tm, 128), _round_up((M + 1) // 2, 128)))
    grid = (pl.cdiv(M, tm_eff),)

    # No wrapper-side padding/casting: reshape is free, the partial last block
    # is handled by the pipeline (its extra columns are never written back).
    r2 = r.reshape(M, H)
    z2 = z.reshape(M, L)
    tx2 = target_x.reshape(M, Xd)

    def row_spec(d):
        return pl.BlockSpec((tm_eff, d), lambda i: (i, 0))

    def full_spec(shape):
        return pl.BlockSpec(shape, lambda i: (0, 0))

    in_specs = [
        row_spec(H), row_spec(L), row_spec(Xd),            # r, z, target_x
        full_spec((H, H2p)), full_spec((L, H2p)),          # w1r, w1z
        full_spec((Xd, H2p)), full_spec((1, H2p)),         # w1x (folded), b1'
        full_spec((H2p, H2p)), full_spec((1, H2p)),        # w2, b2
        full_spec((HR, H2p)), full_spec((HR, 1)),          # whT (W3 folded), bhT
    ]
    out_specs = pl.BlockSpec((HR, tm_eff), lambda i: (0, i))
    out_shape = jax.ShapeDtypeStruct((HR, M), jnp.float32)

    kernel = functools.partial(_decoder_kernel, min_std=min_std, y_dim=Yd)

    outT = pl.pallas_call(
        kernel,
        grid=grid,
        in_specs=in_specs,
        out_specs=out_specs,
        out_shape=out_shape,
        compiler_params=pltpu.CompilerParams(
            dimension_semantics=("parallel",)),
    )(r2, z2, tx2,
      prepped["w1r"], prepped["w1z"], prepped["w1x"], prepped["b1"],
      prepped["w2"], prepped["b2"],
      prepped["whT"], prepped["bhT"])

    # Un-transpose the tiny (Yd, M) slabs in the wrapper (cheap XLA op).
    mean = outT[0:Yd, :].T.reshape(B, T, Yd)
    log_sigma = outT[Yd:2 * Yd, :].T.reshape(B, T, Yd)
    sigma = outT[2 * Yd:3 * Yd, :].T.reshape(B, T, Yd)
    return mean, sigma, log_sigma


def decoder_reference(r, z, target_x, params, *, min_std=0.01):
    """Pure-JAX reference with the original (unfused) op ordering."""
    x = jnp.einsum("btd,dh->bth", target_x, params["wt"]) + params["bt"][0]
    h = jnp.concatenate([r, z, x], axis=-1)
    h = jax.nn.relu(jnp.einsum("bth,hk->btk", h, params["w1"]) + params["b1"][0])
    h = jax.nn.relu(jnp.einsum("bth,hk->btk", h, params["w2"]) + params["b2"][0])
    h = jnp.einsum("bth,hk->btk", h, params["w3"]) + params["b3"][0]
    mean = jnp.einsum("bth,hy->bty", h, params["wm"]) + params["bm"][0]
    log_sigma = jnp.einsum("bth,hy->bty", h, params["ws"]) + params["bs"][0]
    sigma = min_std + (1.0 - min_std) * _softplus(log_sigma)
    return mean, sigma, log_sigma


def init_params(key, x_dim, y_dim, hidden_dim, latent_dim):
    """Deterministic init mimicking nn.Linear default (U[-1/sqrt(fan_in), ...])."""
    H2 = 2 * hidden_dim + latent_dim

    def linear(k, fan_in, fan_out):
        kw, kb = jax.random.split(k)
        bound = 1.0 / np.sqrt(fan_in)
        w = jax.random.uniform(kw, (fan_in, fan_out), jnp.float32, -bound, bound)
        b = jax.random.uniform(kb, (1, fan_out), jnp.float32, -bound, bound)
        return w, b

    keys = jax.random.split(key, 6)
    wt, bt = linear(keys[0], x_dim, hidden_dim)
    w1, b1 = linear(keys[1], H2, H2)
    w2, b2 = linear(keys[2], H2, H2)
    w3, b3 = linear(keys[3], H2, H2)
    wm, bm = linear(keys[4], H2, y_dim)
    ws, bs = linear(keys[5], H2, y_dim)
    return dict(wt=wt, bt=bt, w1=w1, b1=b1, w2=w2, b2=b2,
                w3=w3, b3=b3, wm=wm, bm=bm, ws=ws, bs=bs)


if __name__ == "__main__":
    # small shapes consistent with the module
    B, T = 2, 8
    x_dim, y_dim = 4, 2
    hidden_dim, latent_dim = 32, 32
    min_std = 0.01

    key = jax.random.PRNGKey(0)
    kp, kr, kz, kx = jax.random.split(key, 4)

    params = init_params(kp, x_dim, y_dim, hidden_dim, latent_dim)
    r = jax.random.normal(kr, (B, T, hidden_dim), jnp.float32)
    z = jax.random.normal(kz, (B, T, latent_dim), jnp.float32)
    target_x = jax.random.normal(kx, (B, T, x_dim), jnp.float32)

    ref_mean, ref_sigma, ref_logsig = decoder_reference(
        r, z, target_x, params, min_std=min_std)

    # f32-operand path (weight folding changes op order; TPU default matmul
    # precision runs f32 dots via bf16 passes, so compare with a small margin).
    p_f32 = prepare_decoder_params(params, compute_dtype=jnp.float32)
    mean, sigma, log_sigma = decoder_forward(r, z, target_x, p_f32,
                                             min_std=min_std)
    jax.block_until_ready((mean, sigma, log_sigma))
    np.testing.assert_allclose(np.asarray(mean), np.asarray(ref_mean),
                               rtol=2e-2, atol=2e-2)
    np.testing.assert_allclose(np.asarray(sigma), np.asarray(ref_sigma),
                               rtol=2e-2, atol=2e-2)
    np.testing.assert_allclose(np.asarray(log_sigma), np.asarray(ref_logsig),
                               rtol=2e-2, atol=2e-2)

    # bf16-operand fast path (default; v5e/v6e/v7x): looser tolerance vs f32 ref.
    p_bf16 = prepare_decoder_params(params, compute_dtype=jnp.bfloat16)
    mean_b, sigma_b, logsig_b = decoder_forward(r, z, target_x, p_bf16,
                                                min_std=min_std)
    jax.block_until_ready((mean_b, sigma_b, logsig_b))
    np.testing.assert_allclose(np.asarray(mean_b), np.asarray(ref_mean),
                               rtol=1e-1, atol=1e-1)
    np.testing.assert_allclose(np.asarray(sigma_b), np.asarray(ref_sigma),
                               rtol=1e-1, atol=1e-1)
    np.testing.assert_allclose(np.asarray(logsig_b), np.asarray(ref_logsig),
                               rtol=1e-1, atol=1e-1)

    print("KERNEL_OK")
</pallas_src>

<mosaic_0001>
module attributes {stable_mosaic.version = 11 : i64} {
  func.func @_decoder_kernel(%arg0: i32, %arg1: memref<128x32xf32, #tpu.memory_space<vmem>>, %arg2: memref<128x32xf32, #tpu.memory_space<vmem>>, %arg3: memref<128x4xf32, #tpu.memory_space<vmem>>, %arg4: memref<32x128xf32, #tpu.memory_space<vmem>>, %arg5: memref<32x128xf32, #tpu.memory_space<vmem>>, %arg6: memref<4x128xf32, #tpu.memory_space<vmem>>, %arg7: memref<1x128xf32, #tpu.memory_space<vmem>>, %arg8: memref<128x128xf32, #tpu.memory_space<vmem>>, %arg9: memref<1x128xf32, #tpu.memory_space<vmem>>, %arg10: memref<8x128xf32, #tpu.memory_space<vmem>>, %arg11: memref<8x1xf32, #tpu.memory_space<vmem>>, %arg12: memref<8x128xf32, #tpu.memory_space<vmem>>) attributes {dimension_semantics = [#tpu.dimension_semantics<parallel>], iteration_bounds = array<i64: 1>, scalar_prefetch = 0 : i64, scratch_operands = 0 : i64, tpu.core_type = #tpu.core_type<tc>, window_params = [{transform_indices = @transform_0, window_bounds = array<i64: 128, 32>}, {transform_indices = @transform_1, window_bounds = array<i64: 128, 32>}, {transform_indices = @transform_2, window_bounds = array<i64: 128, 4>}, {pipeline_mode = #tpu.pipeline_mode<synchronous>, transform_indices = @transform_3, window_bounds = array<i64: 32, 128>}, {pipeline_mode = #tpu.pipeline_mode<synchronous>, transform_indices = @transform_4, window_bounds = array<i64: 32, 128>}, {pipeline_mode = #tpu.pipeline_mode<synchronous>, transform_indices = @transform_5, window_bounds = array<i64: 4, 128>}, {pipeline_mode = #tpu.pipeline_mode<synchronous>, transform_indices = @transform_6, window_bounds = array<i64: 1, 128>}, {pipeline_mode = #tpu.pipeline_mode<synchronous>, transform_indices = @transform_7, window_bounds = array<i64: 128, 128>}, {pipeline_mode = #tpu.pipeline_mode<synchronous>, transform_indices = @transform_8, window_bounds = array<i64: 1, 128>}, {pipeline_mode = #tpu.pipeline_mode<synchronous>, transform_indices = @transform_9, window_bounds = array<i64: 8, 128>}, {pipeline_mode = #tpu.pipeline_mode<synchronous>, transform_indices = @transform_10, window_bounds = array<i64: 8, 1>}, {transform_indices = @transform_11, window_bounds = array<i64: 8, 128>}]} {
    %c0 = arith.constant 0 : index
    %c0_0 = arith.constant 0 : index
    %0 = vector.load %arg1[%c0, %c0_0] : memref<128x32xf32, #tpu.memory_space<vmem>>, vector<128x32xf32>
    %c0_1 = arith.constant 0 : index
    %c0_2 = arith.constant 0 : index
    %1 = vector.load %arg4[%c0_1, %c0_2] : memref<32x128xf32, #tpu.memory_space<vmem>>, vector<32x128xf32>
    %cst = arith.constant dense<0.000000e+00> : vector<128x128xf32>
    %2 = tpu.matmul %0, %1, %cst {dimension_numbers = #tpu.dot_dimension_numbers<[1], [0], [0], [1], [0, 0, 1, 1], [], []>} : vector<128x32xf32>, vector<32x128xf32>, vector<128x128xf32> -> vector<128x128xf32>
    %c0_3 = arith.constant 0 : index
    %c0_4 = arith.constant 0 : index
    %3 = vector.load %arg2[%c0_3, %c0_4] : memref<128x32xf32, #tpu.memory_space<vmem>>, vector<128x32xf32>
    %c0_5 = arith.constant 0 : index
    %c0_6 = arith.constant 0 : index
    %4 = vector.load %arg5[%c0_5, %c0_6] : memref<32x128xf32, #tpu.memory_space<vmem>>, vector<32x128xf32>
    %cst_7 = arith.constant dense<0.000000e+00> : vector<128x128xf32>
    %5 = tpu.matmul %3, %4, %cst_7 {dimension_numbers = #tpu.dot_dimension_numbers<[1], [0], [0], [1], [0, 0, 1, 1], [], []>} : vector<128x32xf32>, vector<32x128xf32>, vector<128x128xf32> -> vector<128x128xf32>
    %6 = arith.addf %2, %5 : vector<128x128xf32>
    %c0_8 = arith.constant 0 : index
    %c0_9 = arith.constant 0 : index
    %7 = vector.load %arg3[%c0_8, %c0_9] : memref<128x4xf32, #tpu.memory_space<vmem>>, vector<128x4xf32>
    %c0_10 = arith.constant 0 : index
    %c0_11 = arith.constant 0 : index
    %8 = vector.load %arg6[%c0_10, %c0_11] : memref<4x128xf32, #tpu.memory_space<vmem>>, vector<4x128xf32>
    %cst_12 = arith.constant dense<0.000000e+00> : vector<128x128xf32>
    %9 = tpu.matmul %7, %8, %cst_12 {dimension_numbers = #tpu.dot_dimension_numbers<[1], [0], [0], [1], [0, 0, 1, 1], [], []>} : vector<128x4xf32>, vector<4x128xf32>, vector<128x128xf32> -> vector<128x128xf32>
    %10 = arith.addf %6, %9 : vector<128x128xf32>
    %c0_13 = arith.constant 0 : index
    %c0_14 = arith.constant 0 : index
    %11 = vector.load %arg7[%c0_13, %c0_14] : memref<1x128xf32, #tpu.memory_space<vmem>>, vector<1x128xf32>
    %12 = vector.broadcast %11 : vector<1x128xf32> to vector<128x128xf32>
    %13 = arith.addf %10, %12 : vector<128x128xf32>
    %cst_15 = arith.constant 0.000000e+00 : f32
    %14 = vector.broadcast %cst_15 : f32 to vector<128x128xf32>
    %15 = arith.maximumf %13, %14 : vector<128x128xf32>
    %c0_16 = arith.constant 0 : index
    %c0_17 = arith.constant 0 : index
    %16 = vector.load %arg8[%c0_16, %c0_17] : memref<128x128xf32, #tpu.memory_space<vmem>>, vector<128x128xf32>
    %cst_18 = arith.constant dense<0.000000e+00> : vector<128x128xf32>
    %17 = tpu.matmul %15, %16, %cst_18 {dimension_numbers = #tpu.dot_dimension_numbers<[1], [0], [0], [1], [0, 0, 1, 1], [], []>} : vector<128x128xf32>, vector<128x128xf32>, vector<128x128xf32> -> vector<128x128xf32>
    %c0_19 = arith.constant 0 : index
    %c0_20 = arith.constant 0 : index
    %18 = vector.load %arg9[%c0_19, %c0_20] : memref<1x128xf32, #tpu.memory_space<vmem>>, vector<1x128xf32>
    %19 = vector.broadcast %18 : vector<1x128xf32> to vector<128x128xf32>
    %20 = arith.addf %17, %19 : vector<128x128xf32>
    %cst_21 = arith.constant 0.000000e+00 : f32
    %21 = vector.broadcast %cst_21 : f32 to vector<128x128xf32>
    %22 = arith.maximumf %20, %21 : vector<128x128xf32>
    %c0_22 = arith.constant 0 : index
    %c0_23 = arith.constant 0 : index
    %23 = vector.load %arg10[%c0_22, %c0_23] : memref<8x128xf32, #tpu.memory_space<vmem>>, vector<8x128xf32>
    %cst_24 = arith.constant dense<0.000000e+00> : vector<8x128xf32>
    %24 = tpu.matmul %23, %22, %cst_24 {dimension_numbers = #tpu.dot_dimension_numbers<[1], [1], [0], [0], [0, 0, 1, 0], [], []>} : vector<8x128xf32>, vector<128x128xf32>, vector<8x128xf32> -> vector<8x128xf32>
    %c0_25 = arith.constant 0 : index
    %c0_26 = arith.constant 0 : index
    %25 = vector.load %arg11[%c0_25, %c0_26] : memref<8x1xf32, #tpu.memory_space<vmem>>, vector<8x1xf32>
    %26 = vector.broadcast %25 : vector<8x1xf32> to vector<8x128xf32>
    %27 = arith.addf %24, %26 : vector<8x128xf32>
    %28 = tpu.iota {dimensions = array<i32: 0>} : vector<8x128xi32>
    %c4_i32 = arith.constant 4 : i32
    %29 = vector.broadcast %c4_i32 : i32 to vector<8x128xi32>
    %30 = arith.cmpi sge, %28, %29 : vector<8x128xi32>
    %c6_i32 = arith.constant 6 : i32
    %31 = vector.broadcast %c6_i32 : i32 to vector<8x128xi32>
    %32 = arith.cmpi slt, %28, %31 : vector<8x128xi32>
    %33 = arith.andi %30, %32 : vector<8x128xi1>
    %cst_27 = arith.constant 0.000000e+00 : f32
    %34 = vector.broadcast %cst_27 : f32 to vector<8x128xf32>
    %35 = arith.maximumf %27, %34 : vector<8x128xf32>
    %36 = math.absf %27 : vector<8x128xf32>
    %cst_28 = arith.constant 0.000000e+00 : f32
    %37 = vector.broadcast %cst_28 : f32 to vector<8x128xf32>
    %38 = arith.subf %37, %36 : vector<8x128xf32>
    %39 = math.exp %38 : vector<8x128xf32>
    %cst_29 = arith.constant 1.000000e+00 : f32
    %40 = vector.broadcast %cst_29 : f32 to vector<8x128xf32>
    %41 = arith.addf %40, %39 : vector<8x128xf32>
    %42 = math.log %41 : vector<8x128xf32>
    %43 = arith.addf %35, %42 : vector<8x128xf32>
    %cst_30 = arith.constant 9.900000e-01 : f32
    %44 = vector.broadcast %cst_30 : f32 to vector<8x128xf32>
    %45 = arith.mulf %44, %43 : vector<8x128xf32>
    %cst_31 = arith.constant 0.00999999977 : f32
    %46 = vector.broadcast %cst_31 : f32 to vector<8x128xf32>
    %47 = arith.addf %46, %45 : vector<8x128xf32>
    %48 = arith.select %33, %47, %27 : vector<8x128xi1>, vector<8x128xf32>
    %c0_32 = arith.constant 0 : index
    %c0_33 = arith.constant 0 : index
    %49 = vector.load %arg12[%c0_32, %c0_33] : memref<8x128xf32, #tpu.memory_space<vmem>>, vector<8x128xf32>
    tpu.vector_store %arg12[%c0_32, %c0_33], %48 {strides = array<i32>} : memref<8x128xf32, #tpu.memory_space<vmem>>, vector<8x128xf32>,
    return
  }
  func.func @transform_0(%arg0: i32) -> (i32, i32) {
    %c0_i32 = arith.constant 0 : i32
    %c0_i32_0 = arith.constant 0 : i32
    return %arg0, %c0_i32 : i32, i32
  }
  func.func @transform_1(%arg0: i32) -> (i32, i32) {
    %c0_i32 = arith.constant 0 : i32
    %c0_i32_0 = arith.constant 0 : i32
    return %arg0, %c0_i32 : i32, i32
  }
  func.func @transform_2(%arg0: i32) -> (i32, i32) {
    %c0_i32 = arith.constant 0 : i32
    %c0_i32_0 = arith.constant 0 : i32
    return %arg0, %c0_i32 : i32, i32
  }
  func.func @transform_3(%arg0: i32) -> (i32, i32) {
    %c0_i32 = arith.constant 0 : i32
    %c0_i32_0 = arith.constant 0 : i32
    %c0_i32_1 = arith.constant 0 : i32
    return %c0_i32, %c0_i32_0 : i32, i32
  }
  func.func @transform_4(%arg0: i32) -> (i32, i32) {
    %c0_i32 = arith.constant 0 : i32
    %c0_i32_0 = arith.constant 0 : i32
    %c0_i32_1 = arith.constant 0 : i32
    return %c0_i32, %c0_i32_0 : i32, i32
  }
  func.func @transform_5(%arg0: i32) -> (i32, i32) {
    %c0_i32 = arith.constant 0 : i32
    %c0_i32_0 = arith.constant 0 : i32
    %c0_i32_1 = arith.constant 0 : i32
    return %c0_i32, %c0_i32_0 : i32, i32
  }
  func.func @transform_6(%arg0: i32) -> (i32, i32) {
    %c0_i32 = arith.constant 0 : i32
    %c0_i32_0 = arith.constant 0 : i32
    %c0_i32_1 = arith.constant 0 : i32
    return %c0_i32, %c0_i32_0 : i32, i32
  }
  func.func @transform_7(%arg0: i32) -> (i32, i32) {
    %c0_i32 = arith.constant 0 : i32
    %c0_i32_0 = arith.constant 0 : i32
    %c0_i32_1 = arith.constant 0 : i32
    return %c0_i32, %c0_i32_0 : i32, i32
  }
  func.func @transform_8(%arg0: i32) -> (i32, i32) {
    %c0_i32 = arith.constant 0 : i32
    %c0_i32_0 = arith.constant 0 : i32
    %c0_i32_1 = arith.constant 0 : i32
    return %c0_i32, %c0_i32_0 : i32, i32
  }
  func.func @transform_9(%arg0: i32) -> (i32, i32) {
    %c0_i32 = arith.constant 0 : i32
    %c0_i32_0 = arith.constant 0 : i32
    %c0_i32_1 = arith.constant 0 : i32
    return %c0_i32, %c0_i32_0 : i32, i32
  }
  func.func @transform_10(%arg0: i32) -> (i32, i32) {
    %c0_i32 = arith.constant 0 : i32
    %c0_i32_0 = arith.constant 0 : i32
    %c0_i32_1 = arith.constant 0 : i32
    return %c0_i32, %c0_i32_0 : i32, i32
  }
  func.func @transform_11(%arg0: i32) -> (i32, i32) {
    %c0_i32 = arith.constant 0 : i32
    %c0_i32_0 = arith.constant 0 : i32
    return %c0_i32, %arg0 : i32, i32
  }
}

</mosaic_0001>

<llo_original>
// kernel: tpu_custom_call.1
$region0: #{tpu_custom_call.1}
  #allocation0 [shape = 'u32[]', space=smem, size = 0x4, offset = 0x4, fixed_abs, tag = 'smem constant byte address 0x4 - core index']
  #allocation1 [shape = 'u32[144,128]{1,0:T(1,128)}', space=vmem, size = 0x12000, scoped, tag = 'internal scratch']
  %s0 = inlined_call_operand.hbm [shape: f32[16,32], index: 0, kind: input, shape index: {}]
  %s1 = inlined_call_operand.hbm [shape: f32[16,32], index: 1, kind: input, shape index: {}]
  %s2 = inlined_call_operand.vmem [shape: f32[16,4], index: 2, kind: input, shape index: {}]
  %s3 = inlined_call_operand.vmem [shape: f32[32,128], index: 3, kind: input, shape index: {}]
  %s4 = inlined_call_operand.hbm [shape: f32[32,128], index: 4, kind: input, shape index: {}]
  %s5 = inlined_call_operand.vmem [shape: f32[4,128], index: 5, kind: input, shape index: {}]
  %s6 = inlined_call_operand.vmem [shape: f32[1,128], index: 6, kind: input, shape index: {}]
  %s7 = inlined_call_operand.hbm [shape: f32[128,128], index: 7, kind: input, shape index: {}]
  %s8 = inlined_call_operand.vmem [shape: f32[1,128], index: 8, kind: input, shape index: {}]
  %s9 = inlined_call_operand.vmem [shape: f32[8,128], index: 9, kind: input, shape index: {}]
  %s10 = inlined_call_operand.vmem [shape: f32[8,1], index: 10, kind: input, shape index: {}]
  %s11 = inlined_call_operand.hbm [shape: f32[8,16], index: 11, kind: output, shape index: {}]
  %s12 = sld [smem:[#allocation0]]
  $region70: #{tpu_custom_call.1} parent=0
    _
  %s14 = ssub.s32 1, %s12
  %s15 = scalar_select 0, %s14, %s12
  $region1: #{tpu_custom_call.1} parent=0
    #allocation2 [shape = 'u8[65536]{0}', space=vmem, size = 0x10000, scoped, tag = 'input window, operand 0, single buffered']
    #allocation3 [shape = 's32[1]{0}', space=sflag, size = 0x4, scoped, tag = 'scoped memory for tpu_custom_call.1']
    #allocation4 [shape = 's32[1]{0}', space=sflag, size = 0x4, scoped, tag = 'scoped memory for tpu_custom_call.1']
    #allocation5 [shape = 'u8[65536]{0}', space=vmem, size = 0x10000, scoped, tag = 'input window, operand 1, single buffered']
    #allocation6 [shape = 's32[1]{0}', space=sflag, size = 0x4, scoped, tag = 'scoped memory for tpu_custom_call.1']
    #allocation7 [shape = 'u8[16384]{0}', space=vmem, size = 0x4000, scoped, tag = 'input window, operand 4, single buffered']
    #allocation8 [shape = 'u8[65536]{0}', space=vmem, size = 0x10000, scoped, tag = 'input window, operand 7, single buffered']
    #allocation9 [shape = 's32[1]{0}', space=sflag, size = 0x4, scoped, tag = 'scoped memory for tpu_custom_call.1']
    #allocation10 [shape = 'u8[4096]{0}', space=vmem, size = 0x1000, scoped, tag = 'output window, operand 0, single buffered']
    %16 = vsyncpa [#allocation3], 0
    %17 = vsyncpa [#allocation6], 0
    %18 = vsyncpa [#allocation9], 0
    %19 = vsyncpa [#allocation4], 0
    // Predicated region
    $region2: #{tpu_custom_call.1} parent=1 // pred_check
      _
    $region3: #{tpu_custom_call.1} parent=1 // pred_check_branch
      %21 = sbr.rel (0) target = $region5
    $region4: #{tpu_custom_call.1} parent=1 // pred_region
      %s23 = ssub.s32 2048, 256
      %24 = vsyncadd [#allocation3], %s23
      %s25 = sshll.u32 [#allocation2], 4
      %s26 = int_to_ptr.vmem [resolvable:$true] %s25
      %31 = dma.hbm_to_vmem [thread:$0]  %s0, 256, %s26, [#allocation3], 128, 128, 8
    $region5: #{tpu_custom_call.1} parent=1 // pred_fallthru
      _
    // Predicated region
    $region6: #{tpu_custom_call.1} parent=1 // pred_check
      _
    $region7: #{tpu_custom_call.1} parent=1 // pred_check_branch
      %33 = sbr.rel (0) target = $region9
    $region8: #{tpu_custom_call.1} parent=1 // pred_region
      %s35 = ssub.s32 2048, 256
      %36 = vsyncadd [#allocation6], %s35
      %s37 = sshll.u32 [#allocation5], 4
      %s38 = int_to_ptr.vmem [resolvable:$true] %s37
      %43 = dma.hbm_to_vmem [thread:$0]  %s1, 256, %s38, [#allocation6], 128, 128, 8
    $region9: #{tpu_custom_call.1} parent=1 // pred_fallthru
      _
    // Predicated region
    $region10: #{tpu_custom_call.1} parent=1 // pred_check
      _
    $region11: #{tpu_custom_call.1} parent=1 // pred_check_branch
      %45 = sbr.rel (0) target = $region13
    $region12: #{tpu_custom_call.1} parent=1 // pred_region
      _
    $region13: #{tpu_custom_call.1} parent=1 // pred_fallthru
      _
    // Predicated region
    $region14: #{tpu_custom_call.1} parent=1 // pred_check
      _
    $region15: #{tpu_custom_call.1} parent=1 // pred_check_branch
      %47 = sbr.rel (0) target = $region17
    $region16: #{tpu_custom_call.1} parent=1 // pred_region
      _
    $region17: #{tpu_custom_call.1} parent=1 // pred_fallthru
      _
    // Predicated region
    $region18: #{tpu_custom_call.1} parent=1 // pred_check
      _
    $region19: #{tpu_custom_call.1} parent=1 // pred_check_branch
      %49 = sbr.rel (0) target = $region21
    $region20: #{tpu_custom_call.1} parent=1 // pred_region
      %s51 = ssub.s32 512, 512
      %52 = vsyncadd [#allocation6], %s51
      %s53 = sshll.u32 [#allocation7], 4
      %s54 = int_to_ptr.vmem [resolvable:$true] %s53
      %59 = dma.hbm_to_vmem [thread:$0]  %s4, 512, %s54, [#allocation6], 128, 128, 8
    $region21: #{tpu_custom_call.1} parent=1 // pred_fallthru
      _
    // Predicated region
    $region22: #{tpu_custom_call.1} parent=1 // pred_check
      _
    $region23: #{tpu_custom_call.1} parent=1 // pred_check_branch
      %61 = sbr.rel (0) target = $region25
    $region24: #{tpu_custom_call.1} parent=1 // pred_region
      _
    $region25: #{tpu_custom_call.1} parent=1 // pred_fallthru
      _
    // Predicated region
    $region26: #{tpu_custom_call.1} parent=1 // pred_check
      _
    $region27: #{tpu_custom_call.1} parent=1 // pred_check_branch
      %63 = sbr.rel (0) target = $region29
    $region28: #{tpu_custom_call.1} parent=1 // pred_region
      _
    $region29: #{tpu_custom_call.1} parent=1 // pred_fallthru
      _
    // Predicated region
    $region30: #{tpu_custom_call.1} parent=1 // pred_check
      _
    $region31: #{tpu_custom_call.1} parent=1 // pred_check_branch
      %65 = sbr.rel (0) target = $region33
    $region32: #{tpu_custom_call.1} parent=1 // pred_region
      %s67 = ssub.s32 2048, 2048
      %68 = vsyncadd [#allocation9], %s67
      %s69 = sshll.u32 [#allocation8], 4
      %s70 = int_to_ptr.vmem [resolvable:$true] %s69
      %75 = dma.hbm_to_vmem [thread:$0]  %s7, 2048, %s70, [#allocation9], 128, 128, 8
    $region33: #{tpu_custom_call.1} parent=1 // pred_fallthru
      _
    // Predicated region
    $region34: #{tpu_custom_call.1} parent=1 // pred_check
      _
    $region35: #{tpu_custom_call.1} parent=1 // pred_check_branch
      %77 = sbr.rel (0) target = $region37
    $region36: #{tpu_custom_call.1} parent=1 // pred_region
      _
    $region37: #{tpu_custom_call.1} parent=1 // pred_fallthru
      _
    // Predicated region
    $region38: #{tpu_custom_call.1} parent=1 // pred_check
      _
    $region39: #{tpu_custom_call.1} parent=1 // pred_check_branch
      %79 = sbr.rel (0) target = $region41
    $region40: #{tpu_custom_call.1} parent=1 // pred_region
      _
    $region41: #{tpu_custom_call.1} parent=1 // pred_fallthru
      _
    // Predicated region
    $region42: #{tpu_custom_call.1} parent=1 // pred_check
      _
    $region43: #{tpu_custom_call.1} parent=1 // pred_check_branch
      %81 = sbr.rel (0) target = $region45
    $region44: #{tpu_custom_call.1} parent=1 // pred_region
      _
    $region45: #{tpu_custom_call.1} parent=1 // pred_fallthru
      _
    // Predicated region
    $region46: #{tpu_custom_call.1} parent=1 // pred_check
      _
    $region47: #{tpu_custom_call.1} parent=1 // pred_check_branch
      %83 = sbr.rel (0) target = $region49
    $region48: #{tpu_custom_call.1} parent=1 // pred_region
      %84 = dma.done [#allocation3], 2048
    $region49: #{tpu_custom_call.1} parent=1 // pred_fallthru
      _
    // Predicated region
    $region50: #{tpu_custom_call.1} parent=1 // pred_check
      _
    $region51: #{tpu_custom_call.1} parent=1 // pred_check_branch
      %86 = sbr.rel (0) target = $region53
    $region52: #{tpu_custom_call.1} parent=1 // pred_region
      %87 = dma.done [#allocation6], 2048
    $region53: #{tpu_custom_call.1} parent=1 // pred_fallthru
      _
    // Predicated region
    $region54: #{tpu_custom_call.1} parent=1 // pred_check
      _
    $region55: #{tpu_custom_call.1} parent=1 // pred_check_branch
      %89 = sbr.rel (0) target = $region57
    $region56: #{tpu_custom_call.1} parent=1 // pred_region
      %90 = dma.done [#allocation6], 512
    $region57: #{tpu_custom_call.1} parent=1 // pred_fallthru
      _
    // Predicated region
    $region58: #{tpu_custom_call.1} parent=1 // pred_check
      _
    $region59: #{tpu_custom_call.1} parent=1 // pred_check_branch
      %92 = sbr.rel (0) target = $region61
    $region60: #{tpu_custom_call.1} parent=1 // pred_region
      %93 = dma.done [#allocation9], 2048
    $region61: #{tpu_custom_call.1} parent=1 // pred_fallthru
      _
    %v94 = vld [vmem:[#allocation2] sm:$0xff]
    %v95 = vld [vmem:[#allocation2 + $0x8] sm:$0xff]
    %v96 = vld [vmem:[#allocation2 + $0x10] sm:$0xff]
    %v97 = vld [vmem:[#allocation2 + $0x18] sm:$0xff]
    %v98 = vld [vmem:[#allocation2 + $0x20] sm:$0xff]
    %v99 = vld [vmem:[#allocation2 + $0x28] sm:$0xff]
    %v100 = vld [vmem:[#allocation2 + $0x30] sm:$0xff]
    %v101 = vld [vmem:[#allocation2 + $0x38] sm:$0xff]
    %v102 = vld [vmem:[#allocation2 + $0x40] sm:$0xff]
    %v103 = vld [vmem:[#allocation2 + $0x48] sm:$0xff]
    %v104 = vld [vmem:[#allocation2 + $0x50] sm:$0xff]
    %v105 = vld [vmem:[#allocation2 + $0x58] sm:$0xff]
    %v106 = vld [vmem:[#allocation2 + $0x60] sm:$0xff]
    %v107 = vld [vmem:[#allocation2 + $0x68] sm:$0xff]
    %v108 = vld [vmem:[#allocation2 + $0x70] sm:$0xff]
    %v109 = vld [vmem:[#allocation2 + $0x78] sm:$0xff]
    %v110 = vld [vmem:[%s3] sm:$0xff]
    %v111 = vld [vmem:[%s3 + $0x8] sm:$0xff]
    %v112 = vld [vmem:[%s3 + $0x10] sm:$0xff]
    %v113 = vld [vmem:[%s3 + $0x18] sm:$0xff]
    %v114 = vld [vmem:[#allocation5] sm:$0xff]
    %v115 = vld [vmem:[#allocation5 + $0x8] sm:$0xff]
    %v116 = vld [vmem:[#allocation5 + $0x10] sm:$0xff]
    %v117 = vld [vmem:[#allocation5 + $0x18] sm:$0xff]
    %v118 = vld [vmem:[#allocation5 + $0x20] sm:$0xff]
    %v119 = vld [vmem:[#allocation5 + $0x28] sm:$0xff]
    %v120 = vld [vmem:[#allocation5 + $0x30] sm:$0xff]
    %v121 = vld [vmem:[#allocation5 + $0x38] sm:$0xff]
    %v122 = vld [vmem:[#allocation5 + $0x40] sm:$0xff]
    %v123 = vld [vmem:[#allocation5 + $0x48] sm:$0xff]
    %v124 = vld [vmem:[#allocation5 + $0x50] sm:$0xff]
    %v125 = vld [vmem:[#allocation5 + $0x58] sm:$0xff]
    %v126 = vld [vmem:[#allocation5 + $0x60] sm:$0xff]
    %v127 = vld [vmem:[#allocation5 + $0x68] sm:$0xff]
    %v128 = vld [vmem:[#allocation5 + $0x70] sm:$0xff]
    %v129 = vld [vmem:[#allocation5 + $0x78] sm:$0xff]
    %v130 = vld [vmem:[#allocation7] sm:$0xff]
    %v131 = vld [vmem:[#allocation7 + $0x8] sm:$0xff]
    %v132 = vld [vmem:[#allocation7 + $0x10] sm:$0xff]
    %v133 = vld [vmem:[#allocation7 + $0x18] sm:$0xff]
    %vm134 = vcmask 261120
    %v136 = vsel %vm134, %v114, 0
    %v139 = vsel %vm134, %v115, 0
    %v142 = vsel %vm134, %v116, 0
    %v145 = vsel %vm134, %v117, 0
    %v148 = vsel %vm134, %v118, 0
    %v151 = vsel %vm134, %v119, 0
    %v154 = vsel %vm134, %v120, 0
    %v157 = vsel %vm134, %v121, 0
    %v160 = vsel %vm134, %v122, 0
    %v163 = vsel %vm134, %v123, 0
    %v166 = vsel %vm134, %v124, 0
    %v169 = vsel %vm134, %v125, 0
    %v172 = vsel %vm134, %v126, 0
    %v175 = vsel %vm134, %v127, 0
    %v178 = vsel %vm134, %v128, 0
    %v181 = vsel %vm134, %v129, 0
    %183 = vmatprep.subr.mxu0 0.0
    %184 = vmatpush1.msra.mxu0 %v130
    %185 = vmatprep.subr.mxu0 0.0
    %186 = vmatpush1.msra.mxu0 %v131
    %187 = vmatprep.subr.mxu0 0.0
    %188 = vmatpush1.msra.mxu0 %v132
    %189 = vmatprep.subr.mxu0 0.0
    %190 = vmatpush1.msra.mxu0 %v133
    %191 = vmatprep.subr.mxu0 0.0
    %192 = vmatpush1.msra.mxu0 0.0
    %193 = vmatprep.subr.mxu0 0.0
    %194 = vmatpush1.msra.mxu0 0.0
    %195 = vmatprep.subr.mxu0 0.0
    %196 = vmatpush1.msra.mxu0 0.0
    %197 = vmatprep.subr.mxu0 0.0
    %198 = vmatpush1.msra.mxu0 0.0
    %199 = vmatprep.subr.mxu0 0.0
    %200 = vmatpush1.msra.mxu0 0.0
    %201 = vmatprep.subr.mxu0 0.0
    %202 = vmatpush1.msra.mxu0 0.0
    %203 = vmatprep.subr.mxu0 0.0
    %204 = vmatpush1.msra.mxu0 0.0
    %205 = vmatprep.subr.mxu0 0.0
    %206 = vmatpush1.msra.mxu0 0.0
    %207 = vmatprep.subr.mxu0 0.0
    %208 = vmatpush1.msra.mxu0 0.0
    %209 = vmatprep.subr.mxu0 0.0
    %210 = vmatpush1.msra.mxu0 0.0
    %211 = vmatprep.subr.mxu0 0.0
    %212 = vmatpush1.msra.mxu0 0.0
    %213 = vmatprep.subr.mxu0 0.0
    %214 = vmatpush1.msra.mxu0 0.0
    %215 = vmatprep.subr.mxu0 0.0
    %216 = vmatpush1.msra.mxu0 0.0
    %217 = vmatprep.subr.mxu0 0.0
    %218 = vmatpush1.msra.mxu0 0.0
    %219 = vmatprep.subr.mxu0 0.0
    %220 = vmatpush1.msra.mxu0 0.0
    %221 = vmatprep.subr.mxu0 0.0
    %222 = vmatpush1.msra.mxu0 0.0
    %223 = vmatprep.subr.mxu0 0.0
    %224 = vmatpush1.msra.mxu0 0.0
    %225 = vmatprep.subr.mxu0 0.0
    %226 = vmatpush1.msra.mxu0 0.0
    %227 = vmatprep.subr.mxu0 0.0
    %228 = vmatpush1.msra.mxu0 0.0
    %229 = vmatprep.subr.mxu0 0.0
    %230 = vmatpush1.msra.mxu0 0.0
    %231 = vmatprep.subr.mxu0 0.0
    %232 = vmatpush1.msra.mxu0 0.0
    %233 = vmatprep.subr.mxu0 0.0
    %234 = vmatpush1.msra.mxu0 0.0
    %235 = vmatprep.subr.mxu0 0.0
    %236 = vmatpush1.msra.mxu0 0.0
    %237 = vmatprep.subr.mxu0 0.0
    %238 = vmatpush1.msra.mxu0 0.0
    %239 = vmatprep.subr.mxu0 0.0
    %240 = vmatpush1.msra.mxu0 0.0
    %241 = vmatprep.subr.mxu0 0.0
    %242 = vmatpush1.msra.mxu0 0.0
    %243 = vmatprep.subr.mxu0 0.0
    %244 = vmatpush1.msra.mxu0 0.0
    %245 = vmatprep.subr.mxu0 0.0
    %246 = vmatpush1.msra.mxu0 0.0
    %247 = vmatprep.mubr.f32.mxu0 0.0
    %248 = vmatmul.mubr.f32.gmra.mrb[0].mxu0 %v136
    %v249 = vpop.f32.mrb[0].mxu0
    %v250 = vadd.f32 0.0, %v249
    %v251 = vpop.f32.mrb[0].mxu0
    %252 = vmatprep.mubr.f32.mxu0 0.0
    %253 = vmatmul.mubr.f32.gmra.mrb[0].mxu0 %v139
    %v254 = vpop.f32.mrb[0].mxu0
    %v255 = vadd.f32 0.0, %v254
    %v256 = vpop.f32.mrb[0].mxu0
    %257 = vmatprep.mubr.f32.mxu0 0.0
    %258 = vmatmul.mubr.f32.gmra.mrb[0].mxu0 %v142
    %v259 = vpop.f32.mrb[0].mxu0
    %v260 = vadd.f32 0.0, %v259
    %v261 = vpop.f32.mrb[0].mxu0
    %262 = vmatprep.mubr.f32.mxu0 0.0
    %263 = vmatmul.mubr.f32.gmra.mrb[0].mxu0 %v145
    %v264 = vpop.f32.mrb[0].mxu0
    %v265 = vadd.f32 0.0, %v264
    %v266 = vpop.f32.mrb[0].mxu0
    %267 = vmatprep.mubr.f32.mxu0 0.0
    %268 = vmatmul.mubr.f32.gmra.mrb[0].mxu0 %v148
    %v269 = vpop.f32.mrb[0].mxu0
    %v270 = vadd.f32 0.0, %v269
    %v271 = vpop.f32.mrb[0].mxu0
    %272 = vmatprep.mubr.f32.mxu0 0.0
    %273 = vmatmul.mubr.f32.gmra.mrb[0].mxu0 %v151
    %v274 = vpop.f32.mrb[0].mxu0
    %v275 = vadd.f32 0.0, %v274
    %v276 = vpop.f32.mrb[0].mxu0
    %277 = vmatprep.mubr.f32.mxu0 0.0
    %278 = vmatmul.mubr.f32.gmra.mrb[0].mxu0 %v154
    %v279 = vpop.f32.mrb[0].mxu0
    %v280 = vadd.f32 0.0, %v279
    %v281 = vpop.f32.mrb[0].mxu0
    %282 = vmatprep.mubr.f32.mxu0 0.0
    %283 = vmatmul.mubr.f32.gmra.mrb[0].mxu0 %v157
    %v284 = vpop.f32.mrb[0].mxu0
    %v285 = vadd.f32 0.0, %v284
    %v286 = vpop.f32.mrb[0].mxu0
    %287 = vmatprep.mubr.f32.mxu0 0.0
    %288 = vmatmul.mubr.f32.gmra.mrb[0].mxu0 %v160
    %v289 = vpop.f32.mrb[0].mxu0
    %v290 = vadd.f32 0.0, %v289
    %v291 = vpop.f32.mrb[0].mxu0
    %292 = vmatprep.mubr.f32.mxu0 0.0
    %293 = vmatmul.mubr.f32.gmra.mrb[0].mxu0 %v163
    %v294 = vpop.f32.mrb[0].mxu0
    %v295 = vadd.f32 0.0, %v294
    %v296 = vpop.f32.mrb[0].mxu0
    %297 = vmatprep.mubr.f32.mxu0 0.0
    %298 = vmatmul.mubr.f32.gmra.mrb[0].mxu0 %v166
    %v299 = vpop.f32.mrb[0].mxu0
    %v300 = vadd.f32 0.0, %v299
    %v301 = vpop.f32.mrb[0].mxu0
    %302 = vmatprep.mubr.f32.mxu0 0.0
    %303 = vmatmul.mubr.f32.gmra.mrb[0].mxu0 %v169
    %v304 = vpop.f32.mrb[0].mxu0
    %v305 = vadd.f32 0.0, %v304
    %v306 = vpop.f32.mrb[0].mxu0
    %307 = vmatprep.mubr.f32.mxu0 0.0
    %308 = vmatmul.mubr.f32.gmra.mrb[0].mxu0 %v172
    %v309 = vpop.f32.mrb[0].mxu0
    %v310 = vadd.f32 0.0, %v309
    %v311 = vpop.f32.mrb[0].mxu0
    %312 = vmatprep.mubr.f32.mxu0 0.0
    %313 = vmatmul.mubr.f32.gmra.mrb[0].mxu0 %v175
    %v314 = vpop.f32.mrb[0].mxu0
    %v315 = vadd.f32 0.0, %v314
    %v316 = vpop.f32.mrb[0].mxu0
    %317 = vmatprep.mubr.f32.mxu0 0.0
    %318 = vmatmul.mubr.f32.gmra.mrb[0].mxu0 %v178
    %v319 = vpop.f32.mrb[0].mxu0
    %v320 = vadd.f32 0.0, %v319
    %v321 = vpop.f32.mrb[0].mxu0
    %322 = vmatprep.mubr.f32.mxu0 0.0
    %323 = vmatmul.mubr.f32.gmra.mrb[0].mxu0 %v181
    %v324 = vpop.f32.mrb[0].mxu0
    %v325 = vadd.f32 0.0, %v324
    %v326 = vpop.f32.mrb[0].mxu0
    %327 = vdwg.mxu0
    %v329 = vsel %vm134, %v94, 0
    %v332 = vsel %vm134, %v95, 0
    %v335 = vsel %vm134, %v96, 0
    %v338 = vsel %vm134, %v97, 0
    %v341 = vsel %vm134, %v98, 0
    %v344 = vsel %vm134, %v99, 0
    %v347 = vsel %vm134, %v100, 0
    %v350 = vsel %vm134, %v101, 0
    %v353 = vsel %vm134, %v102, 0
    %v356 = vsel %vm134, %v103, 0
    %v359 = vsel %vm134, %v104, 0
    %v362 = vsel %vm134, %v105, 0
    %v365 = vsel %vm134, %v106, 0
    %v368 = vsel %vm134, %v107, 0
    %v371 = vsel %vm134, %v108, 0
    %v374 = vsel %vm134, %v109, 0
    %376 = vmatprep.subr.mxu0 0.0
    %377 = vmatpush1.msra.mxu0 %v110
    %378 = vmatprep.subr.mxu0 0.0
    %379 = vmatpush1.msra.mxu0 %v111
    %380 = vmatprep.subr.mxu0 0.0
    %381 = vmatpush1.msra.mxu0 %v112
    %382 = vmatprep.subr.mxu0 0.0
    %383 = vmatpush1.msra.mxu0 %v113
    %384 = vmatprep.subr.mxu0 0.0
    %385 = vmatpush1.msra.mxu0 0.0
    %386 = vmatprep.subr.mxu0 0.0
    %387 = vmatpush1.msra.mxu0 0.0
    %388 = vmatprep.subr.mxu0 0.0
    %389 = vmatpush1.msra.mxu0 0.0
    %390 = vmatprep.subr.mxu0 0.0
    %391 = vmatpush1.msra.mxu0 0.0
    %392 = vmatprep.subr.mxu0 0.0
    %393 = vmatpush1.msra.mxu0 0.0
    %394 = vmatprep.subr.mxu0 0.0
    %395 = vmatpush1.msra.mxu0 0.0
    %396 = vmatprep.subr.mxu0 0.0
    %397 = vmatpush1.msra.mxu0 0.0
    %398 = vmatprep.subr.mxu0 0.0
    %399 = vmatpush1.msra.mxu0 0.0
    %400 = vmatprep.subr.mxu0 0.0
    %401 = vmatpush1.msra.mxu0 0.0
    %402 = vmatprep.subr.mxu0 0.0
    %403 = vmatpush1.msra.mxu0 0.0
    %404 = vmatprep.subr.mxu0 0.0
    %405 = vmatpush1.msra.mxu0 0.0
    %406 = vmatprep.subr.mxu0 0.0
    %407 = vmatpush1.msra.mxu0 0.0
    %408 = vmatprep.subr.mxu0 0.0
    %409 = vmatpush1.msra.mxu0 0.0
    %410 = vmatprep.subr.mxu0 0.0
    %411 = vmatpush1.msra.mxu0 0.0
    %412 = vmatprep.subr.mxu0 0.0
    %413 = vmatpush1.msra.mxu0 0.0
    %414 = vmatprep.subr.mxu0 0.0
    %415 = vmatpush1.msra.mxu0 0.0
    %416 = vmatprep.subr.mxu0 0.0
    %417 = vmatpush1.msra.mxu0 0.0
    %418 = vmatprep.subr.mxu0 0.0
    %419 = vmatpush1.msra.mxu0 0.0
    %420 = vmatprep.subr.mxu0 0.0
    %421 = vmatpush1.msra.mxu0 0.0
    %422 = vmatprep.subr.mxu0 0.0
    %423 = vmatpush1.msra.mxu0 0.0
    %424 = vmatprep.subr.mxu0 0.0
    %425 = vmatpush1.msra.mxu0 0.0
    %426 = vmatprep.subr.mxu0 0.0
    %427 = vmatpush1.msra.mxu0 0.0
    %428 = vmatprep.subr.mxu0 0.0
    %429 = vmatpush1.msra.mxu0 0.0
    %430 = vmatprep.subr.mxu0 0.0
    %431 = vmatpush1.msra.mxu0 0.0
    %432 = vmatprep.subr.mxu0 0.0
    %433 = vmatpush1.msra.mxu0 0.0
    %434 = vmatprep.subr.mxu0 0.0
    %435 = vmatpush1.msra.mxu0 0.0
    %436 = vmatprep.subr.mxu0 0.0
    %437 = vmatpush1.msra.mxu0 0.0
    %438 = vmatprep.subr.mxu0 0.0
    %439 = vmatpush1.msra.mxu0 0.0
    %440 = vmatprep.mubr.f32.mxu0 0.0
    %441 = vmatmul.mubr.f32.gmra.mrb[0].mxu0 %v329
    %v442 = vpop.f32.mrb[0].mxu0
    %v443 = vadd.f32 %v250, %v442
    %v444 = vpop.f32.mrb[0].mxu0
    %445 = vmatprep.mubr.f32.mxu0 0.0
    %446 = vmatmul.mubr.f32.gmra.mrb[0].mxu0 %v332
    %v447 = vpop.f32.mrb[0].mxu0
    %v448 = vadd.f32 %v255, %v447
    %v449 = vpop.f32.mrb[0].mxu0
    %450 = vmatprep.mubr.f32.mxu0 0.0
    %451 = vmatmul.mubr.f32.gmra.mrb[0].mxu0 %v335
    %v452 = vpop.f32.mrb[0].mxu0
    %v453 = vadd.f32 %v260, %v452
    %v454 = vpop.f32.mrb[0].mxu0
    %455 = vmatprep.mubr.f32.mxu0 0.0
    %456 = vmatmul.mubr.f32.gmra.mrb[0].mxu0 %v338
    %v457 = vpop.f32.mrb[0].mxu0
    %v458 = vadd.f32 %v265, %v457
    %v459 = vpop.f32.mrb[0].mxu0
    %460 = vmatprep.mubr.f32.mxu0 0.0
    %461 = vmatmul.mubr.f32.gmra.mrb[0].mxu0 %v341
    %v462 = vpop.f32.mrb[0].mxu0
    %v463 = vadd.f32 %v270, %v462
    %v464 = vpop.f32.mrb[0].mxu0
    %465 = vmatprep.mubr.f32.mxu0 0.0
    %466 = vmatmul.mubr.f32.gmra.mrb[0].mxu0 %v344
    %v467 = vpop.f32.mrb[0].mxu0
    %v468 = vadd.f32 %v275, %v467
    %v469 = vpop.f32.mrb[0].mxu0
    %470 = vmatprep.mubr.f32.mxu0 0.0
    %471 = vmatmul.mubr.f32.gmra.mrb[0].mxu0 %v347
    %v472 = vpop.f32.mrb[0].mxu0
    %v473 = vadd.f32 %v280, %v472
    %v474 = vpop.f32.mrb[0].mxu0
    %475 = vmatprep.mubr.f32.mxu0 0.0
    %476 = vmatmul.mubr.f32.gmra.mrb[0].mxu0 %v350
    %v477 = vpop.f32.mrb[0].mxu0
    %v478 = vadd.f32 %v285, %v477
    %v479 = vpop.f32.mrb[0].mxu0
    %480 = vmatprep.mubr.f32.mxu0 0.0
    %481 = vmatmul.mubr.f32.gmra.mrb[0].mxu0 %v353
    %v482 = vpop.f32.mrb[0].mxu0
    %v483 = vadd.f32 %v290, %v482
    %v484 = vpop.f32.mrb[0].mxu0
    %485 = vmatprep.mubr.f32.mxu0 0.0
    %486 = vmatmul.mubr.f32.gmra.mrb[0].mxu0 %v356
    %v487 = vpop.f32.mrb[0].mxu0
    %v488 = vadd.f32 %v295, %v487
    %v489 = vpop.f32.mrb[0].mxu0
    %490 = vmatprep.mubr.f32.mxu0 0.0
    %491 = vmatmul.mubr.f32.gmra.mrb[0].mxu0 %v359
    %v492 = vpop.f32.mrb[0].mxu0
    %v493 = vadd.f32 %v300, %v492
    %v494 = vpop.f32.mrb[0].mxu0
    %495 = vmatprep.mubr.f32.mxu0 0.0
    %496 = vmatmul.mubr.f32.gmra.mrb[0].mxu0 %v362
    %v497 = vpop.f32.mrb[0].mxu0
    %v498 = vadd.f32 %v305, %v497
    %v499 = vpop.f32.mrb[0].mxu0
    %500 = vmatprep.mubr.f32.mxu0 0.0
    %501 = vmatmul.mubr.f32.gmra.mrb[0].mxu0 %v365
    %v502 = vpop.f32.mrb[0].mxu0
    %v503 = vadd.f32 %v310, %v502
    %v504 = vpop.f32.mrb[0].mxu0
    %505 = vmatprep.mubr.f32.mxu0 0.0
    %506 = vmatmul.mubr.f32.gmra.mrb[0].mxu0 %v368
    %v507 = vpop.f32.mrb[0].mxu0
    %v508 = vadd.f32 %v315, %v507
    %v509 = vpop.f32.mrb[0].mxu0
    %510 = vmatprep.mubr.f32.mxu0 0.0
    %511 = vmatmul.mubr.f32.gmra.mrb[0].mxu0 %v371
    %v512 = vpop.f32.mrb[0].mxu0
    %v513 = vadd.f32 %v320, %v512
    %v514 = vpop.f32.mrb[0].mxu0
    %515 = vmatprep.mubr.f32.mxu0 0.0
    %516 = vmatmul.mubr.f32.gmra.mrb[0].mxu0 %v374
    %v517 = vpop.f32.mrb[0].mxu0
    %v518 = vadd.f32 %v325, %v517
    %v519 = vpop.f32.mrb[0].mxu0
    %520 = vdwg.mxu0
    %v521 = vld [vmem:[%s2] sm:$0xff]
    %v522 = vld [vmem:[%s2 + $0x8] sm:$0xff]
    %v523 = vld [vmem:[%s2 + $0x10] sm:$0xff]
    %v524 = vld [vmem:[%s2 + $0x18] sm:$0xff]
    %v525 = vld [vmem:[%s2 + $0x20] sm:$0xff]
    %v526 = vld [vmem:[%s2 + $0x28] sm:$0xff]
    %v527 = vld [vmem:[%s2 + $0x30] sm:$0xff]
    %v528 = vld [vmem:[%s2 + $0x38] sm:$0xff]
    %v529 = vld [vmem:[%s2 + $0x40] sm:$0xff]
    %v530 = vld [vmem:[%s2 + $0x48] sm:$0xff]
    %v531 = vld [vmem:[%s2 + $0x50] sm:$0xff]
    %v532 = vld [vmem:[%s2 + $0x58] sm:$0xff]
    %v533 = vld [vmem:[%s2 + $0x60] sm:$0xff]
    %v534 = vld [vmem:[%s2 + $0x68] sm:$0xff]
    %v535 = vld [vmem:[%s2 + $0x70] sm:$0xff]
    %v536 = vld [vmem:[%s2 + $0x78] sm:$0xff]
    %v537 = vld [vmem:[%s5] sm:$0xf]
    %vm538 = vcmask 31744
    %v540 = vsel %vm538, %v521, 0
    %v543 = vsel %vm538, %v522, 0
    %v546 = vsel %vm538, %v523, 0
    %v549 = vsel %vm538, %v524, 0
    %v552 = vsel %vm538, %v525, 0
    %v555 = vsel %vm538, %v526, 0
    %v558 = vsel %vm538, %v527, 0
    %v561 = vsel %vm538, %v528, 0
    %v564 = vsel %vm538, %v529, 0
    %v567 = vsel %vm538, %v530, 0
    %v570 = vsel %vm538, %v531, 0
    %v573 = vsel %vm538, %v532, 0
    %v576 = vsel %vm538, %v533, 0
    %v579 = vsel %vm538, %v534, 0
    %v582 = vsel %vm538, %v535, 0
    %v585 = vsel %vm538, %v536, 0
    %vm587 = vcmask 1043456
    %v589 = vsel %vm587, %v537, 0
    %591 = vmatprep.subr.mxu0 0.0
    %592 = vmatpush1.msra.mxu0 %v589
    %593 = vmatprep.subr.mxu0 0.0
    %594 = vmatpush1.msra.mxu0 0.0
    %595 = vmatprep.subr.mxu0 0.0
    %596 = vmatpush1.msra.mxu0 0.0
    %597 = vmatprep.subr.mxu0 0.0
    %598 = vmatpush1.msra.mxu0 0.0
    %599 = vmatprep.subr.mxu0 0.0
    %600 = vmatpush1.msra.mxu0 0.0
    %601 = vmatprep.subr.mxu0 0.0
    %602 = vmatpush1.msra.mxu0 0.0
    %603 = vmatprep.subr.mxu0 0.0
    %604 = vmatpush1.msra.mxu0 0.0
    %605 = vmatprep.subr.mxu0 0.0
    %606 = vmatpush1.msra.mxu0 0.0
    %607 = vmatprep.subr.mxu0 0.0
    %608 = vmatpush1.msra.mxu0 0.0
    %609 = vmatprep.subr.mxu0 0.0
    %610 = vmatpush1.msra.mxu0 0.0
    %611 = vmatprep.subr.mxu0 0.0
    %612 = vmatpush1.msra.mxu0 0.0
    %613 = vmatprep.subr.mxu0 0.0
    %614 = vmatpush1.msra.mxu0 0.0
    %615 = vmatprep.subr.mxu0 0.0
    %616 = vmatpush1.msra.mxu0 0.0
    %617 = vmatprep.subr.mxu0 0.0
    %618 = vmatpush1.msra.mxu0 0.0
    %619 = vmatprep.subr.mxu0 0.0
    %620 = vmatpush1.msra.mxu0 0.0
    %621 = vmatprep.subr.mxu0 0.0
    %622 = vmatpush1.msra.mxu0 0.0
    %623 = vmatprep.subr.mxu0 0.0
    %624 = vmatpush1.msra.mxu0 0.0
    %625 = vmatprep.subr.mxu0 0.0
    %626 = vmatpush1.msra.mxu0 0.0
    %627 = vmatprep.subr.mxu0 0.0
    %628 = vmatpush1.msra.mxu0 0.0
    %629 = vmatprep.subr.mxu0 0.0
    %630 = vmatpush1.msra.mxu0 0.0
    %631 = vmatprep.subr.mxu0 0.0
    %632 = vmatpush1.msra.mxu0 0.0
    %633 = vmatprep.subr.mxu0 0.0
    %634 = vmatpush1.msra.mxu0 0.0
    %635 = vmatprep.subr.mxu0 0.0
    %636 = vmatpush1.msra.mxu0 0.0
    %637 = vmatprep.subr.mxu0 0.0
    %638 = vmatpush1.msra.mxu0 0.0
    %639 = vmatprep.subr.mxu0 0.0
    %640 = vmatpush1.msra.mxu0 0.0
    %641 = vmatprep.subr.mxu0 0.0
    %642 = vmatpush1.msra.mxu0 0.0
    %643 = vmatprep.subr.mxu0 0.0
    %644 = vmatpush1.msra.mxu0 0.0
    %645 = vmatprep.subr.mxu0 0.0
    %646 = vmatpush1.msra.mxu0 0.0
    %647 = vmatprep.subr.mxu0 0.0
    %648 = vmatpush1.msra.mxu0 0.0
    %649 = vmatprep.subr.mxu0 0.0
    %650 = vmatpush1.msra.mxu0 0.0
    %651 = vmatprep.subr.mxu0 0.0
    %652 = vmatpush1.msra.mxu0 0.0
    %653 = vmatprep.subr.mxu0 0.0
    %654 = vmatpush1.msra.mxu0 0.0
    %655 = vmatprep.mubr.f32.mxu0 0.0
    %656 = vmatmul.mubr.f32.gmra.mrb[0].mxu0 %v540
    %v657 = vpop.f32.mrb[0].mxu0
    %v658 = vadd.f32 0.0, %v657
    %v659 = vpop.f32.mrb[0].mxu0
    %660 = vmatprep.mubr.f32.mxu0 0.0
    %661 = vmatmul.mubr.f32.gmra.mrb[0].mxu0 %v543
    %v662 = vpop.f32.mrb[0].mxu0
    %v663 = vadd.f32 0.0, %v662
    %v664 = vpop.f32.mrb[0].mxu0
    %665 = vmatprep.mubr.f32.mxu0 0.0
    %666 = vmatmul.mubr.f32.gmra.mrb[0].mxu0 %v546
    %v667 = vpop.f32.mrb[0].mxu0
    %v668 = vadd.f32 0.0, %v667
    %v669 = vpop.f32.mrb[0].mxu0
    %670 = vmatprep.mubr.f32.mxu0 0.0
    %671 = vmatmul.mubr.f32.gmra.mrb[0].mxu0 %v549
    %v672 = vpop.f32.mrb[0].mxu0
    %v673 = vadd.f32 0.0, %v672
    %v674 = vpop.f32.mrb[0].mxu0
    %675 = vmatprep.mubr.f32.mxu0 0.0
    %676 = vmatmul.mubr.f32.gmra.mrb[0].mxu0 %v552
    %v677 = vpop.f32.mrb[0].mxu0
    %v678 = vadd.f32 0.0, %v677
    %v679 = vpop.f32.mrb[0].mxu0
    %680 = vmatprep.mubr.f32.mxu0 0.0
    %681 = vmatmul.mubr.f32.gmra.mrb[0].mxu0 %v555
    %v682 = vpop.f32.mrb[0].mxu0
    %v683 = vadd.f32 0.0, %v682
    %v684 = vpop.f32.mrb[0].mxu0
    %685 = vmatprep.mubr.f32.mxu0 0.0
    %686 = vmatmul.mubr.f32.gmra.mrb[0].mxu0 %v558
    %v687 = vpop.f32.mrb[0].mxu0
    %v688 = vadd.f32 0.0, %v687
    %v689 = vpop.f32.mrb[0].mxu0
    %690 = vmatprep.mubr.f32.mxu0 0.0
    %691 = vmatmul.mubr.f32.gmra.mrb[0].mxu0 %v561
    %v692 = vpop.f32.mrb[0].mxu0
    %v693 = vadd.f32 0.0, %v692
    %v694 = vpop.f32.mrb[0].mxu0
    %695 = vmatprep.mubr.f32.mxu0 0.0
    %696 = vmatmul.mubr.f32.gmra.mrb[0].mxu0 %v564
    %v697 = vpop.f32.mrb[0].mxu0
    %v698 = vadd.f32 0.0, %v697
    %v699 = vpop.f32.mrb[0].mxu0
    %700 = vmatprep.mubr.f32.mxu0 0.0
    %701 = vmatmul.mubr.f32.gmra.mrb[0].mxu0 %v567
    %v702 = vpop.f32.mrb[0].mxu0
    %v703 = vadd.f32 0.0, %v702
    %v704 = vpop.f32.mrb[0].mxu0
    %705 = vmatprep.mubr.f32.mxu0 0.0
    %706 = vmatmul.mubr.f32.gmra.mrb[0].mxu0 %v570
    %v707 = vpop.f32.mrb[0].mxu0
    %v708 = vadd.f32 0.0, %v707
    %v709 = vpop.f32.mrb[0].mxu0
    %710 = vmatprep.mubr.f32.mxu0 0.0
    %711 = vmatmul.mubr.f32.gmra.mrb[0].mxu0 %v573
    %v712 = vpop.f32.mrb[0].mxu0
    %v713 = vadd.f32 0.0, %v712
    %v714 = vpop.f32.mrb[0].mxu0
    %715 = vmatprep.mubr.f32.mxu0 0.0
    %716 = vmatmul.mubr.f32.gmra.mrb[0].mxu0 %v576
    %v717 = vpop.f32.mrb[0].mxu0
    %v718 = vadd.f32 0.0, %v717
    %v719 = vpop.f32.mrb[0].mxu0
    %720 = vmatprep.mubr.f32.mxu0 0.0
    %721 = vmatmul.mubr.f32.gmra.mrb[0].mxu0 %v579
    %v722 = vpop.f32.mrb[0].mxu0
    %v723 = vadd.f32 0.0, %v722
    %v724 = vpop.f32.mrb[0].mxu0
    %725 = vmatprep.mubr.f32.mxu0 0.0
    %726 = vmatmul.mubr.f32.gmra.mrb[0].mxu0 %v582
    %v727 = vpop.f32.mrb[0].mxu0
    %v728 = vadd.f32 0.0, %v727
    %v729 = vpop.f32.mrb[0].mxu0
    %730 = vmatprep.mubr.f32.mxu0 0.0
    %731 = vmatmul.mubr.f32.gmra.mrb[0].mxu0 %v585
    %v732 = vpop.f32.mrb[0].mxu0
    %v733 = vadd.f32 0.0, %v732
    %v734 = vpop.f32.mrb[0].mxu0
    %735 = vdwg.mxu0
    %v736 = vadd.f32 %v443, %v658
    %v737 = vadd.f32 %v448, %v663
    %v738 = vadd.f32 %v453, %v668
    %v739 = vadd.f32 %v458, %v673
    %v740 = vadd.f32 %v463, %v678
    %v741 = vadd.f32 %v468, %v683
    %v742 = vadd.f32 %v473, %v688
    %v743 = vadd.f32 %v478, %v693
    %v744 = vadd.f32 %v483, %v698
    %v745 = vadd.f32 %v488, %v703
    %v746 = vadd.f32 %v493, %v708
    %v747 = vadd.f32 %v498, %v713
    %v748 = vadd.f32 %v503, %v718
    %v749 = vadd.f32 %v508, %v723
    %v750 = vadd.f32 %v513, %v728
    %v751 = vadd.f32 %v518, %v733
    %v752 = vld [vmem:[%s6] sm:$0x1]
    %v754 = vlaneseq
    %v755 = vshrl.u32 %v754, 7
    %v756 = vsub.s32 0, %v755
    %v757 = vrot.slane %v752, %v756
    %v759 = vadd.f32 %v736, %v757
    %v760 = vadd.f32 %v737, %v757
    %v761 = vadd.f32 %v738, %v757
    %v762 = vadd.f32 %v739, %v757
    %v763 = vadd.f32 %v740, %v757
    %v764 = vadd.f32 %v741, %v757
    %v765 = vadd.f32 %v742, %v757
    %v766 = vadd.f32 %v743, %v757
    %v767 = vadd.f32 %v744, %v757
    %v768 = vadd.f32 %v745, %v757
    %v769 = vadd.f32 %v746, %v757
    %v770 = vadd.f32 %v747, %v757
    %v771 = vadd.f32 %v748, %v757
    %v772 = vadd.f32 %v749, %v757
    %v773 = vadd.f32 %v750, %v757
    %v774 = vadd.f32 %v751, %v757
    %v775 = vmax.f32 %v759, 0.0
    %v776 = vmax.f32 %v760, 0.0
    %v777 = vmax.f32 %v761, 0.0
    %v778 = vmax.f32 %v762, 0.0
    %v779 = vmax.f32 %v763, 0.0
    %v780 = vmax.f32 %v764, 0.0
    %v781 = vmax.f32 %v765, 0.0
    %v782 = vmax.f32 %v766, 0.0
    %v783 = vmax.f32 %v767, 0.0
    %v784 = vmax.f32 %v768, 0.0
    %v785 = vmax.f32 %v769, 0.0
    %v786 = vmax.f32 %v770, 0.0
    %v787 = vmax.f32 %v771, 0.0
    %v788 = vmax.f32 %v772, 0.0
    %v789 = vmax.f32 %v773, 0.0
    %v790 = vmax.f32 %v774, 0.0
    %v791 = vld [vmem:[#allocation8] sm:$0xff]
    %v792 = vld [vmem:[#allocation8 + $0x8] sm:$0xff]
    %v793 = vld [vmem:[#allocation8 + $0x10] sm:$0xff]
    %v794 = vld [vmem:[#allocation8 + $0x18] sm:$0xff]
    %v795 = vld [vmem:[#allocation8 + $0x20] sm:$0xff]
    %v796 = vld [vmem:[#allocation8 + $0x28] sm:$0xff]
    %v797 = vld [vmem:[#allocation8 + $0x30] sm:$0xff]
    %v798 = vld [vmem:[#allocation8 + $0x38] sm:$0xff]
    %v799 = vld [vmem:[#allocation8 + $0x40] sm:$0xff]
    %v800 = vld [vmem:[#allocation8 + $0x48] sm:$0xff]
    %v801 = vld [vmem:[#allocation8 + $0x50] sm:$0xff]
    %v802 = vld [vmem:[#allocation8 + $0x58] sm:$0xff]
    %v803 = vld [vmem:[#allocation8 + $0x60] sm:$0xff]
    %v804 = vld [vmem:[#allocation8 + $0x68] sm:$0xff]
    %v805 = vld [vmem:[#allocation8 + $0x70] sm:$0xff]
    %v806 = vld [vmem:[#allocation8 + $0x78] sm:$0xff]
    %v807 = vld [vmem:[%s8] sm:$0x1]
    %v809 = vlaneseq
    %v810 = vshrl.u32 %v809, 7
    %v811 = vsub.s32 0, %v810
    %v812 = vrot.slane %v807, %v811
    %814 = vmatprep.subr.mxu0 0.0
    %815 = vmatpush1.msra.mxu0 %v791
    %816 = vmatprep.subr.mxu0 0.0
    %817 = vmatpush1.msra.mxu0 %v792
    %818 = vmatprep.subr.mxu0 0.0
    %819 = vmatpush1.msra.mxu0 %v793
    %820 = vmatprep.subr.mxu0 0.0
    %821 = vmatpush1.msra.mxu0 %v794
    %822 = vmatprep.subr.mxu0 0.0
    %823 = vmatpush1.msra.mxu0 %v795
    %824 = vmatprep.subr.mxu0 0.0
    %825 = vmatpush1.msra.mxu0 %v796
    %826 = vmatprep.subr.mxu0 0.0
    %827 = vmatpush1.msra.mxu0 %v797
    %828 = vmatprep.subr.mxu0 0.0
    %829 = vmatpush1.msra.mxu0 %v798
    %830 = vmatprep.subr.mxu0 0.0
    %831 = vmatpush1.msra.mxu0 %v799
    %832 = vmatprep.subr.mxu0 0.0
    %833 = vmatpush1.msra.mxu0 %v800
    %834 = vmatprep.subr.mxu0 0.0
    %835 = vmatpush1.msra.mxu0 %v801
    %836 = vmatprep.subr.mxu0 0.0
    %837 = vmatpush1.msra.mxu0 %v802
    %838 = vmatprep.subr.mxu0 0.0
    %839 = vmatpush1.msra.mxu0 %v803
    %840 = vmatprep.subr.mxu0 0.0
    %841 = vmatpush1.msra.mxu0 %v804
    %842 = vmatprep.subr.mxu0 0.0
    %843 = vmatpush1.msra.mxu0 %v805
    %844 = vmatprep.subr.mxu0 0.0
    %845 = vmatpush1.msra.mxu0 %v806
    %846 = vmatprep.subr.mxu0 0.0
    %847 = vmatpush1.msra.mxu0 0.0
    %848 = vmatprep.subr.mxu0 0.0
    %849 = vmatpush1.msra.mxu0 0.0
    %850 = vmatprep.subr.mxu0 0.0
    %851 = vmatpush1.msra.mxu0 0.0
    %852 = vmatprep.subr.mxu0 0.0
    %853 = vmatpush1.msra.mxu0 0.0
    %854 = vmatprep.subr.mxu0 0.0
    %855 = vmatpush1.msra.mxu0 0.0
    %856 = vmatprep.subr.mxu0 0.0
    %857 = vmatpush1.msra.mxu0 0.0
    %858 = vmatprep.subr.mxu0 0.0
    %859 = vmatpush1.msra.mxu0 0.0
    %860 = vmatprep.subr.mxu0 0.0
    %861 = vmatpush1.msra.mxu0 0.0
    %862 = vmatprep.subr.mxu0 0.0
    %863 = vmatpush1.msra.mxu0 0.0
    %864 = vmatprep.subr.mxu0 0.0
    %865 = vmatpush1.msra.mxu0 0.0
    %866 = vmatprep.subr.mxu0 0.0
    %867 = vmatpush1.msra.mxu0 0.0
    %868 = vmatprep.subr.mxu0 0.0
    %869 = vmatpush1.msra.mxu0 0.0
    %870 = vmatprep.subr.mxu0 0.0
    %871 = vmatpush1.msra.mxu0 0.0
    %872 = vmatprep.subr.mxu0 0.0
    %873 = vmatpush1.msra.mxu0 0.0
    %874 = vmatprep.subr.mxu0 0.0
    %875 = vmatpush1.msra.mxu0 0.0
    %876 = vmatprep.subr.mxu0 0.0
    %877 = vmatpush1.msra.mxu0 0.0
    %878 = vmatprep.mubr.f32.mxu0 0.0
    %879 = vmatmul.mubr.f32.gmra.mrb[0].mxu0 %v775
    %v880 = vpop.f32.mrb[0].mxu0
    %v881 = vadd.f32 %v812, %v880
    %v882 = vpop.f32.mrb[0].mxu0
    %883 = vmatprep.mubr.f32.mxu0 0.0
    %884 = vmatmul.mubr.f32.gmra.mrb[0].mxu0 %v776
    %v885 = vpop.f32.mrb[0].mxu0
    %v886 = vadd.f32 %v812, %v885
    %v887 = vpop.f32.mrb[0].mxu0
    %888 = vmatprep.mubr.f32.mxu0 0.0
    %889 = vmatmul.mubr.f32.gmra.mrb[0].mxu0 %v777
    %v890 = vpop.f32.mrb[0].mxu0
    %v891 = vadd.f32 %v812, %v890
    %v892 = vpop.f32.mrb[0].mxu0
    %893 = vmatprep.mubr.f32.mxu0 0.0
    %894 = vmatmul.mubr.f32.gmra.mrb[0].mxu0 %v778
    %v895 = vpop.f32.mrb[0].mxu0
    %v896 = vadd.f32 %v812, %v895
    %v897 = vpop.f32.mrb[0].mxu0
    %898 = vmatprep.mubr.f32.mxu0 0.0
    %899 = vmatmul.mubr.f32.gmra.mrb[0].mxu0 %v779
    %v900 = vpop.f32.mrb[0].mxu0
    %v901 = vadd.f32 %v812, %v900
    %v902 = vpop.f32.mrb[0].mxu0
    %903 = vmatprep.mubr.f32.mxu0 0.0
    %904 = vmatmul.mubr.f32.gmra.mrb[0].mxu0 %v780
    %v905 = vpop.f32.mrb[0].mxu0
    %v906 = vadd.f32 %v812, %v905
    %v907 = vpop.f32.mrb[0].mxu0
    %908 = vmatprep.mubr.f32.mxu0 0.0
    %909 = vmatmul.mubr.f32.gmra.mrb[0].mxu0 %v781
    %v910 = vpop.f32.mrb[0].mxu0
    %v911 = vadd.f32 %v812, %v910
    %v912 = vpop.f32.mrb[0].mxu0
    %913 = vmatprep.mubr.f32.mxu0 0.0
    %914 = vmatmul.mubr.f32.gmra.mrb[0].mxu0 %v782
    %v915 = vpop.f32.mrb[0].mxu0
    %v916 = vadd.f32 %v812, %v915
    %v917 = vpop.f32.mrb[0].mxu0
    %918 = vmatprep.mubr.f32.mxu0 0.0
    %919 = vmatmul.mubr.f32.gmra.mrb[0].mxu0 %v783
    %v920 = vpop.f32.mrb[0].mxu0
    %v921 = vadd.f32 %v812, %v920
    %v922 = vpop.f32.mrb[0].mxu0
    %923 = vmatprep.mubr.f32.mxu0 0.0
    %924 = vmatmul.mubr.f32.gmra.mrb[0].mxu0 %v784
    %v925 = vpop.f32.mrb[0].mxu0
    %v926 = vadd.f32 %v812, %v925
    %v927 = vpop.f32.mrb[0].mxu0
    %928 = vmatprep.mubr.f32.mxu0 0.0
    %929 = vmatmul.mubr.f32.gmra.mrb[0].mxu0 %v785
    %v930 = vpop.f32.mrb[0].mxu0
    %v931 = vadd.f32 %v812, %v930
    %v932 = vpop.f32.mrb[0].mxu0
    %933 = vmatprep.mubr.f32.mxu0 0.0
    %934 = vmatmul.mubr.f32.gmra.mrb[0].mxu0 %v786
    %v935 = vpop.f32.mrb[0].mxu0
    %v936 = vadd.f32 %v812, %v935
    %v937 = vpop.f32.mrb[0].mxu0
    %938 = vmatprep.mubr.f32.mxu0 0.0
    %939 = vmatmul.mubr.f32.gmra.mrb[0].mxu0 %v787
    %v940 = vpop.f32.mrb[0].mxu0
    %v941 = vadd.f32 %v812, %v940
    %v942 = vpop.f32.mrb[0].mxu0
    %943 = vmatprep.mubr.f32.mxu0 0.0
    %944 = vmatmul.mubr.f32.gmra.mrb[0].mxu0 %v788
    %v945 = vpop.f32.mrb[0].mxu0
    %v946 = vadd.f32 %v812, %v945
    %v947 = vpop.f32.mrb[0].mxu0
    %948 = vmatprep.mubr.f32.mxu0 0.0
    %949 = vmatmul.mubr.f32.gmra.mrb[0].mxu0 %v789
    %v950 = vpop.f32.mrb[0].mxu0
    %v951 = vadd.f32 %v812, %v950
    %v952 = vpop.f32.mrb[0].mxu0
    %953 = vmatprep.mubr.f32.mxu0 0.0
    %954 = vmatmul.mubr.f32.gmra.mrb[0].mxu0 %v790
    %v955 = vpop.f32.mrb[0].mxu0
    %v956 = vadd.f32 %v812, %v955
    %v957 = vpop.f32.mrb[0].mxu0
    %958 = vdwg.mxu0
    %v959 = vmax.f32 %v881, 0.0
    %v960 = vmax.f32 %v886, 0.0
    %v961 = vmax.f32 %v891, 0.0
    %v962 = vmax.f32 %v896, 0.0
    %v963 = vmax.f32 %v901, 0.0
    %v964 = vmax.f32 %v906, 0.0
    %v965 = vmax.f32 %v911, 0.0
    %v966 = vmax.f32 %v916, 0.0
    %v967 = vmax.f32 %v921, 0.0
    %v968 = vmax.f32 %v926, 0.0
    %v969 = vmax.f32 %v931, 0.0
    %v970 = vmax.f32 %v936, 0.0
    %v971 = vmax.f32 %v941, 0.0
    %v972 = vmax.f32 %v946, 0.0
    %v973 = vmax.f32 %v951, 0.0
    %v974 = vmax.f32 %v956, 0.0
    %v975 = vld [vmem:[%s9] sm:$0xff]
    %v976 = vld [vmem:[%s10] sm:$0xff]
    %978 = vset.pattern.permute.xlu0 0
    %979 = vperm.xlu0 %978, %v976
    %v980 = vpop.permute.xlu0 %979
    %982 = vmatprep.subr.mxu0 0.0
    %983 = vmatpush1.xpose.msra.mxu0 %v959
    %984 = vmatprep.subr.mxu0 0.0
    %985 = vmatpush1.xpose.msra.mxu0 %v960
    %986 = vmatprep.subr.mxu0 0.0
    %987 = vmatpush1.xpose.msra.mxu0 %v961
    %988 = vmatprep.subr.mxu0 0.0
    %989 = vmatpush1.xpose.msra.mxu0 %v962
    %990 = vmatprep.subr.mxu0 0.0
    %991 = vmatpush1.xpose.msra.mxu0 %v963
    %992 = vmatprep.subr.mxu0 0.0
    %993 = vmatpush1.xpose.msra.mxu0 %v964
    %994 = vmatprep.subr.mxu0 0.0
    %995 = vmatpush1.xpose.msra.mxu0 %v965
    %996 = vmatprep.subr.mxu0 0.0
    %997 = vmatpush1.xpose.msra.mxu0 %v966
    %998 = vmatprep.subr.mxu0 0.0
    %999 = vmatpush1.xpose.msra.mxu0 %v967
    %1000 = vmatprep.subr.mxu0 0.0
    %1001 = vmatpush1.xpose.msra.mxu0 %v968
    %1002 = vmatprep.subr.mxu0 0.0
    %1003 = vmatpush1.xpose.msra.mxu0 %v969
    %1004 = vmatprep.subr.mxu0 0.0
    %1005 = vmatpush1.xpose.msra.mxu0 %v970
    %1006 = vmatprep.subr.mxu0 0.0
    %1007 = vmatpush1.xpose.msra.mxu0 %v971
    %1008 = vmatprep.subr.mxu0 0.0
    %1009 = vmatpush1.xpose.msra.mxu0 %v972
    %1010 = vmatprep.subr.mxu0 0.0
    %1011 = vmatpush1.xpose.msra.mxu0 %v973
    %1012 = vmatprep.subr.mxu0 0.0
    %1013 = vmatpush1.xpose.msra.mxu0 %v974
    %1014 = vmatprep.subr.mxu0 0.0
    %1015 = vmatpush1.xpose.msra.mxu0 0.0
    %1016 = vmatprep.subr.mxu0 0.0
    %1017 = vmatpush1.xpose.msra.mxu0 0.0
    %1018 = vmatprep.subr.mxu0 0.0
    %1019 = vmatpush1.xpose.msra.mxu0 0.0
    %1020 = vmatprep.subr.mxu0 0.0
    %1021 = vmatpush1.xpose.msra.mxu0 0.0
    %1022 = vmatprep.subr.mxu0 0.0
    %1023 = vmatpush1.xpose.msra.mxu0 0.0
    %1024 = vmatprep.subr.mxu0 0.0
    %1025 = vmatpush1.xpose.msra.mxu0 0.0
    %1026 = vmatprep.subr.mxu0 0.0
    %1027 = vmatpush1.xpose.msra.mxu0 0.0
    %1028 = vmatprep.subr.mxu0 0.0
    %1029 = vmatpush1.xpose.msra.mxu0 0.0
    %1030 = vmatprep.subr.mxu0 0.0
    %1031 = vmatpush1.xpose.msra.mxu0 0.0
    %1032 = vmatprep.subr.mxu0 0.0
    %1033 = vmatpush1.xpose.msra.mxu0 0.0
    %1034 = vmatprep.subr.mxu0 0.0
    %1035 = vmatpush1.xpose.msra.mxu0 0.0
    %1036 = vmatprep.subr.mxu0 0.0
    %1037 = vmatpush1.xpose.msra.mxu0 0.0
    %1038 = vmatprep.subr.mxu0 0.0
    %1039 = vmatpush1.xpose.msra.mxu0 0.0
    %1040 = vmatprep.subr.mxu0 0.0
    %1041 = vmatpush1.xpose.msra.mxu0 0.0
    %1042 = vmatprep.subr.mxu0 0.0
    %1043 = vmatpush1.xpose.msra.mxu0 0.0
    %1044 = vmatprep.subr.mxu0 0.0
    %1045 = vmatpush1.xpose.msra.mxu0 0.0
    %1046 = vmatprep.mubr.f32.mxu0 0.0
    %1047 = vmatmul.mubr.f32.gmra.mrb[0].mxu0 %v975
    %v1048 = vpop.f32.mrb[0].mxu0
    %v1049 = vadd.f32 %v980, %v1048
    %v1050 = vpop.f32.mrb[0].mxu0
    %1051 = vdwg.mxu0
    %v1052 = vlaneseq
    %v1053 = vshrl.u32 %v1052, 7
    %vm1054 = vcmp.ge.s32.totalorder %v1053, 4
    %vm1055 = vcmp.lt.s32.totalorder %v1053, 6
    %vm1056 = vmand %vm1054, %vm1055
    %v1057 = vmax.f32 %v1049, 0.0
    %v1058 = vand.u32 2147483647, %v1049
    %v1059 = vsub.f32 0.0, %v1058
    %v1060 = vmul.f32 %v1059, 1.442695
    %v1061 = vpow.pop %v1060
    %v1062 = vadd.f32 %v1061, 1.0
    %v1063 = vlog2.pop %v1062
    %v1064 = vmul.f32 %v1063, 0.6931472
    %v1065 = vadd.f32 %v1057, %v1064
    %v1066 = vmul.f32 %v1065, 0.99
    %v1067 = vadd.f32 %v1066, 0.01
    %v1068 = vsel %vm1056, %v1067, %v1049
    %1069 = vst [vmem:[#allocation10] sm:$0xff] %v1068
    // Predicated region
    $region62: #{tpu_custom_call.1} parent=1 // pred_check
      _
    $region63: #{tpu_custom_call.1} parent=1 // pred_check_branch
      %1071 = sbr.rel (0) target = $region65
    $region64: #{tpu_custom_call.1} parent=1 // pred_region
      %s1073 = ssub.s32 128, 128
      %1074 = vsyncadd [#allocation4], %s1073
      %s1076 = sshll.u32 [#allocation10], 4
      %s1077 = int_to_ptr.vmem [resolvable:$true] %s1076
      %1079 = dma.vmem_to_hbm [thread:$0]  %s1077, 128, %s11, [#allocation4]
    $region65: #{tpu_custom_call.1} parent=1 // pred_fallthru
      _
    // Predicated region
    $region66: #{tpu_custom_call.1} parent=1 // pred_check
      _
    $region67: #{tpu_custom_call.1} parent=1 // pred_check_branch
      %1081 = sbr.rel (0) target = $region69
    $region68: #{tpu_custom_call.1} parent=1 // pred_region
      %1082 = dma.done [#allocation4], 128
    $region69: #{tpu_custom_call.1} parent=1 // pred_fallthru
      _
    %1083 = vsyncpa [#allocation3], 1
    %1084 = vsyncpa [#allocation6], 1
    %1085 = vsyncpa [#allocation9], 1
    %1086 = vsyncpa [#allocation4], 1

</llo_original>
